<compile_context>
chip_gen: v7x
topology: tpu7x:2x2x1
jax: 0.10.0
libtpu: 0.0.40
codegen_flags: <defaults>
</compile_context>

<pallas_src>
import jax
import jax.numpy as jnp
from jax import lax
from jax.experimental import pallas as pl
from jax.experimental.pallas import tpu as pltpu


def _bicls_accuracy_kernel(cm_ref, out_ref):
    # cm_ref:  (4*B,) in SMEM, row-major flatten of B x [[tn, fp], [fn, tp]].
    # out_ref: (B,)   float32 in SMEM.
    b = out_ref.shape[0]

    def body(i, carry):
        base = i * 4
        tn = cm_ref[base + 0]
        fp = cm_ref[base + 1]
        fn = cm_ref[base + 2]
        tp = cm_ref[base + 3]

        # Exact sums (int32 stays integer; float input stays float32), one
        # float32 divide at the end.
        correct = tn + tp
        total = correct + fp + fn
        out_ref[i] = correct.astype(jnp.float32) / total.astype(jnp.float32)
        return carry

    # Static trip count; fully unrolled scalar code for the LLO scheduler.
    lax.fori_loop(0, b, body, 0, unroll=True)


def _bicls_accuracy_call(cm_flat: jax.Array, batch: int) -> jax.Array:
    """cm_flat: (4*batch,) int32 or float32 -> (batch,) float32 accuracies."""
    return pl.pallas_call(
        _bicls_accuracy_kernel,
        out_shape=jax.ShapeDtypeStruct((batch,), jnp.float32),
        in_specs=[pl.BlockSpec(memory_space=pltpu.MemorySpace.SMEM)],
        out_specs=pl.BlockSpec(memory_space=pltpu.MemorySpace.SMEM),
        cost_estimate=pl.CostEstimate(
            flops=4 * batch,
            transcendentals=0,
            bytes_accessed=4 * 4 * batch + 4 * batch,
        ),
    )(cm_flat)


def bicls_accuracy(confusion_matrix: jax.Array) -> jax.Array:
    """Binary classification accuracy from 2x2 confusion matrices.

    Accepts a single (2, 2) matrix (returns a float32 scalar, matching the
    PyTorch module) or a batch (B, 2, 2) (returns a (B,) float32 vector,
    amortizing the launch overhead across B results).
    Integer or float counts are accepted.
    """
    if confusion_matrix.shape == (2, 2):
        batch = 1
        scalar_out = True
    else:
        assert (
            confusion_matrix.ndim == 3 and confusion_matrix.shape[1:] == (2, 2)
        ), "expected (2, 2) or (B, 2, 2) confusion matrix input"
        batch = confusion_matrix.shape[0]
        scalar_out = False

    # Flatten to 1-D outside the kernel (free reshape). If the upstream
    # producer already emits a flat int32 (4*B,) array, call
    # _bicls_accuracy_call directly and this pre-op disappears.
    if jnp.issubdtype(confusion_matrix.dtype, jnp.floating):
        cm_flat = jnp.ravel(confusion_matrix).astype(jnp.float32)
    else:
        cm_flat = jnp.ravel(confusion_matrix).astype(jnp.int32)

    out = _bicls_accuracy_call(cm_flat, batch)
    return out[0] if scalar_out else out


if __name__ == "__main__":
    key = jax.random.PRNGKey(0)
    k1, k2 = jax.random.split(key)

    # --- Single-matrix case (matches the PyTorch module's forward) ---------
    cm = jax.random.randint(k1, shape=(2, 2), minval=1, maxval=100, dtype=jnp.int32)
    acc = jax.block_until_ready(bicls_accuracy(cm))

    tn, fp, fn, tp = [x.astype(jnp.float32) for x in jnp.ravel(cm)]
    ref = (tn + tp) / (tn + fp + fn + tp)
    assert jnp.allclose(acc, ref, rtol=1e-6, atol=1e-6), (acc, ref)

    # --- Batched case (amortizes launch overhead across B matrices) --------
    B = 4
    cms = jax.random.randint(k2, shape=(B, 2, 2), minval=1, maxval=100, dtype=jnp.int32)
    accs = jax.block_until_ready(bicls_accuracy(cms))

    cms_f = cms.astype(jnp.float32)
    refs = (cms_f[:, 0, 0] + cms_f[:, 1, 1]) / cms_f.reshape(B, 4).sum(axis=-1)
    assert jnp.allclose(accs, refs, rtol=1e-6, atol=1e-6), (accs, refs)

    print("KERNEL_OK")
</pallas_src>

<mosaic_0001>
module attributes {stable_mosaic.version = 11 : i64} {
  func.func @_bicls_accuracy_kernel(%arg0: memref<4xi32, #tpu.memory_space<smem>>, %arg1: memref<1xf32, #tpu.memory_space<smem>>) attributes {dimension_semantics = [], scalar_prefetch = 0 : i64, scratch_operands = 0 : i64, tpu.core_type = #tpu.core_type<tc>} {
    %c0_i32 = arith.constant 0 : i32
    %c4_i32 = arith.constant 4 : i32
    %0 = arith.muli %c0_i32, %c4_i32 : i32
    %c0_i32_0 = arith.constant 0 : i32
    %1 = arith.addi %0, %c0_i32_0 : i32
    %2 = arith.index_cast %1 : i32 to index
    %3 = memref.load %arg0[%2] : memref<4xi32, #tpu.memory_space<smem>>
    %c1_i32 = arith.constant 1 : i32
    %4 = arith.addi %0, %c1_i32 : i32
    %5 = arith.index_cast %4 : i32 to index
    %6 = memref.load %arg0[%5] : memref<4xi32, #tpu.memory_space<smem>>
    %c2_i32 = arith.constant 2 : i32
    %7 = arith.addi %0, %c2_i32 : i32
    %8 = arith.index_cast %7 : i32 to index
    %9 = memref.load %arg0[%8] : memref<4xi32, #tpu.memory_space<smem>>
    %c3_i32 = arith.constant 3 : i32
    %10 = arith.addi %0, %c3_i32 : i32
    %11 = arith.index_cast %10 : i32 to index
    %12 = memref.load %arg0[%11] : memref<4xi32, #tpu.memory_space<smem>>
    %13 = arith.addi %3, %12 : i32
    %14 = arith.addi %13, %6 : i32
    %15 = arith.addi %14, %9 : i32
    %16 = arith.sitofp %13 : i32 to f32
    %17 = arith.sitofp %15 : i32 to f32
    %18 = arith.divf %16, %17 : f32
    %19 = arith.index_cast %c0_i32 : i32 to index
    %20 = memref.load %arg1[%19] : memref<1xf32, #tpu.memory_space<smem>>
    memref.store %18, %arg1[%19] : memref<1xf32, #tpu.memory_space<smem>>
    %c1_i32_1 = arith.constant 1 : i32
    return
  }
}

</mosaic_0001>

<llo_original>
// kernel: tpu_custom_call.1
$region0: #{tpu_custom_call.1}
  #allocation0 [shape = 'u32[]', space=smem, size = 0x4, offset = 0x4, fixed_abs, tag = 'smem constant byte address 0x4 - core index']
  #allocation1 [shape = 'u32[144,128]{1,0:T(1,128)}', space=vmem, size = 0x12000, scoped, tag = 'internal scratch']
  %s0 = inlined_call_operand.hbm [shape: s32[4], index: 0, kind: input, shape index: {}]
  %s1 = inlined_call_operand.hbm [shape: f32[1], index: 1, kind: output, shape index: {}]
  %s2 = sld [smem:[#allocation0]]
  $region18: #{tpu_custom_call.1} parent=0
    _
  %s4 = ssub.s32 1, %s2
  %s5 = scalar_select 0, %s4, %s2
  $region1: #{tpu_custom_call.1} parent=0
    #allocation2 [shape = 'u8[512]{0}', space=smem, size = 0x200, scoped, tag = 'input window, operand 0, single buffered']
    #allocation3 [shape = 's32[1]{0}', space=sflag, size = 0x4, scoped, tag = 'scoped memory for tpu_custom_call.1']
    #allocation4 [shape = 's32[1]{0}', space=sflag, size = 0x4, scoped, tag = 'scoped memory for tpu_custom_call.1']
    #allocation5 [shape = 'u8[512]{0}', space=smem, size = 0x200, scoped, tag = 'output window, operand 0, single buffered']
    %6 = vsyncpa [#allocation3], 0
    %7 = vsyncpa [#allocation4], 0
    // Predicated region
    $region2: #{tpu_custom_call.1} parent=1 // pred_check
      _
    $region3: #{tpu_custom_call.1} parent=1 // pred_check_branch
      %9 = sbr.rel (0) target = $region5
    $region4: #{tpu_custom_call.1} parent=1 // pred_region
      %s11 = ssub.s32 16, 16
      %12 = vsyncadd [#allocation3], %s11
      %15 = dma.hbm_to_smem %s0, 16, [#allocation2], [#allocation3]
    $region5: #{tpu_custom_call.1} parent=1 // pred_fallthru
      _
    // Predicated region
    $region6: #{tpu_custom_call.1} parent=1 // pred_check
      _
    $region7: #{tpu_custom_call.1} parent=1 // pred_check_branch
      %17 = sbr.rel (0) target = $region9
    $region8: #{tpu_custom_call.1} parent=1 // pred_region
      %18 = dma.done [#allocation3], 16
    $region9: #{tpu_custom_call.1} parent=1 // pred_fallthru
      _
    %19 = sfence
    %s20 = sld [smem:[#allocation2]]
    %s21 = sld [smem:[#allocation2 + $0x1]]
    %s22 = sld [smem:[#allocation2 + $0x2]]
    %s23 = sld [smem:[#allocation2 + $0x3]]
    %s24 = sadd.s32 %s20, %s23
    %s25 = sadd.s32 %s24, %s21
    %s26 = sadd.s32 %s25, %s22
    %s27 = scvt.s32.f32 %s24
    %s28 = scvt.s32.f32 %s26
    %v29 = vstv %s28
    %v30 = vrcp.pop %v29
    %s31 = vtos %v30
    %s32 = smul.f32 %s27, %s31
    %s33 = scalar_lea.smem [#allocation5], 0
    %34 = sst [smem:[%s33]] %s32
    // Predicated region
    $region10: #{tpu_custom_call.1} parent=1 // pred_check
      _
    $region11: #{tpu_custom_call.1} parent=1 // pred_check_branch
      %36 = sbr.rel (0) target = $region13
    $region12: #{tpu_custom_call.1} parent=1 // pred_region
      %s38 = ssub.s32 16, 16
      %39 = vsyncadd [#allocation4], %s38
      %42 = dma.smem_to_hbm [#allocation5], 16, %s1, [#allocation4]
    $region13: #{tpu_custom_call.1} parent=1 // pred_fallthru
      _
    // Predicated region
    $region14: #{tpu_custom_call.1} parent=1 // pred_check
      _
    $region15: #{tpu_custom_call.1} parent=1 // pred_check_branch
      %44 = sbr.rel (0) target = $region17
    $region16: #{tpu_custom_call.1} parent=1 // pred_region
      %45 = dma.done [#allocation4], 16
    $region17: #{tpu_custom_call.1} parent=1 // pred_fallthru
      _
    %46 = sfence
    %47 = vsyncpa [#allocation3], 1
    %48 = vsyncpa [#allocation4], 1

</llo_original>
